<compile_context>
chip_gen: v5e
topology: v5e:2x2
jax: 0.10.0
libtpu: 0.0.40
codegen_flags: <defaults>
</compile_context>

<pallas_src>
import jax
import jax.numpy as jnp
from jax.experimental import pallas as pl
from jax.experimental.pallas import tpu as pltpu


def node_kernel(x_ref, w1_ref, b1_ref, w2_ref, b2_ref, o_ref):
    # Linear(d_in -> d_hidden): cast streamed f32 activations to bf16 in-kernel
    # (free VALU work hidden under DMA); bf16 x bf16 -> f32 MXU accumulation.
    x = x_ref[...].astype(jnp.bfloat16)
    h = jnp.dot(x, w1_ref[...], preferred_element_type=jnp.float32)
    # Bias + ReLU epilogue in f32 on the VPU (h never leaves VMEM).
    h = jnp.maximum(h + b1_ref[...], 0.0)
    # Linear(d_hidden -> d_out): bf16 x bf16 -> f32 MXU accumulation.
    y = jnp.dot(h.astype(jnp.bfloat16), w2_ref[...],
                preferred_element_type=jnp.float32)
    o_ref[...] = (y + b2_ref[...]).astype(o_ref.dtype)


def _default_num_steps():
    # v7x has 2 TensorCores per chip -> give each core one tile; single-TC
    # chips (v5e/v6e) want a single grid step (per-step overhead ~0.35 us).
    try:
        kind = jax.devices()[0].device_kind.lower()
    except Exception:
        return 1
    return 2 if "v7" in kind else 1


def node_forward(x, w1, b1, w2, b2, *, num_steps=None):
    """Fused Linear->ReLU->Linear forward. x: (batch, d_in) f32."""
    batch, d_in = x.shape
    d_hidden = w1.shape[1]
    d_out = w2.shape[1]

    if num_steps is None:
        num_steps = _default_num_steps()
    num_steps = max(1, min(num_steps, pl.cdiv(batch, 8)))

    # Batch tile: multiple of 8 sublanes; pad rows only if strictly needed.
    tb = pl.cdiv(pl.cdiv(batch, num_steps), 8) * 8
    bp = tb * num_steps
    x_in = x if bp == batch else jnp.pad(x, ((0, bp - batch), (0, 0)))

    # Resident params: weights in bf16 (native MXU path), biases in f32 for the
    # f32 epilogue. These are tiny one-time casts (few KB).
    w1_b = w1.astype(jnp.bfloat16)
    w2_b = w2.astype(jnp.bfloat16)
    b1_f = b1.astype(jnp.float32)
    b2_f = b2.astype(jnp.float32)

    # True (un-padded) work for the scheduler hint.
    flops = 2 * batch * (d_in * d_hidden + d_hidden * d_out)
    bytes_accessed = (
        batch * d_in * 4                       # f32 activations in
        + w1_b.size * 2 + b1_f.size * 4        # resident params (loaded once)
        + w2_b.size * 2 + b2_f.size * 4
        + batch * d_out * 4                    # f32 output out
    )

    out_p = pl.pallas_call(
        node_kernel,
        out_shape=jax.ShapeDtypeStruct((bp, d_out), jnp.float32),
        grid=(num_steps,),
        in_specs=[
            # streamed per-tile activations; last dim = full array dim (legal)
            pl.BlockSpec((tb, d_in), lambda i: (i, 0)),
            # resident weights/biases: same block every grid step -> no re-DMA
            pl.BlockSpec((d_in, d_hidden), lambda i: (0, 0)),
            pl.BlockSpec((1, d_hidden), lambda i: (0, 0)),
            pl.BlockSpec((d_hidden, d_out), lambda i: (0, 0)),
            pl.BlockSpec((1, d_out), lambda i: (0, 0)),
        ],
        out_specs=pl.BlockSpec((tb, d_out), lambda i: (i, 0)),
        compiler_params=pltpu.CompilerParams(
            # Batch axis is embarrassingly parallel -> shards across the two
            # TensorCores on v7x; harmless on v5e/v6e.
            dimension_semantics=("parallel",),
        ),
        cost_estimate=pl.CostEstimate(
            flops=flops, transcendentals=0, bytes_accessed=bytes_accessed
        ),
    )(x_in, w1_b, b1_f, w2_b, b2_f)

    out = out_p if bp == batch else out_p[:batch]
    return out.astype(x.dtype)


if __name__ == "__main__":
    # Concrete Node(nn.Linear(32, 64), nn.ReLU(), nn.Linear(64, 32)).
    batch, d_in, d_hidden, d_out = 256, 32, 64, 32

    key = jax.random.PRNGKey(0)
    kx, kw1, kb1, kw2, kb2 = jax.random.split(key, 5)

    x = jax.random.normal(kx, (batch, d_in), dtype=jnp.float32)
    # Deterministic parameter init (scaled like torch's fan-in default).
    # TODO(synk): torch.nn.Linear uses uniform(-1/sqrt(fan_in), 1/sqrt(fan_in));
    # normal/sqrt(fan_in) is used here for a self-contained deterministic test.
    w1 = jax.random.normal(kw1, (d_in, d_hidden), dtype=jnp.float32) / jnp.sqrt(d_in)
    b1 = jax.random.normal(kb1, (1, d_hidden), dtype=jnp.float32) * 0.01
    w2 = jax.random.normal(kw2, (d_hidden, d_out), dtype=jnp.float32) / jnp.sqrt(d_hidden)
    b2 = jax.random.normal(kb2, (1, d_out), dtype=jnp.float32) * 0.01

    out = node_forward(x, w1, b1, w2, b2)
    out = jax.block_until_ready(out)

    # Pure-JAX reference of the same Sequential forward using the same
    # bf16-rounded operands the kernel consumes (x, w1, h, w2 in bf16,
    # f32 MXU accumulation, f32 bias/ReLU epilogue).
    x_q = x.astype(jnp.bfloat16)
    w1_q = w1.astype(jnp.bfloat16)
    w2_q = w2.astype(jnp.bfloat16)
    h_ref = jnp.maximum(
        jnp.dot(x_q, w1_q, preferred_element_type=jnp.float32) + b1, 0.0)
    ref = jnp.dot(h_ref.astype(jnp.bfloat16), w2_q,
                  preferred_element_type=jnp.float32) + b2

    assert out.shape == (batch, d_out)
    assert jnp.allclose(out, ref, atol=2e-3, rtol=2e-3), "mismatch vs reference"
    # Sanity vs the pure-f32 module semantics (looser tol: bf16-streamed weights).
    ref_f32 = jnp.maximum(x @ w1 + b1, 0.0) @ w2 + b2
    assert jnp.allclose(out, ref_f32, atol=5e-2, rtol=5e-2), "far from f32 module"

    print("KERNEL_OK")
</pallas_src>

<mosaic_0001>
module attributes {stable_mosaic.version = 11 : i64} {
  func.func @node_kernel(%arg0: i32, %arg1: memref<256x32xf32, #tpu.memory_space<vmem>>, %arg2: memref<32x64xbf16, #tpu.memory_space<vmem>>, %arg3: memref<1x64xf32, #tpu.memory_space<vmem>>, %arg4: memref<64x32xbf16, #tpu.memory_space<vmem>>, %arg5: memref<1x32xf32, #tpu.memory_space<vmem>>, %arg6: memref<256x32xf32, #tpu.memory_space<vmem>>) attributes {dimension_semantics = [#tpu.dimension_semantics<parallel>], iteration_bounds = array<i64: 1>, scalar_prefetch = 0 : i64, scratch_operands = 0 : i64, tpu.core_type = #tpu.core_type<tc>, window_params = [{transform_indices = @transform_0, window_bounds = array<i64: 256, 32>}, {pipeline_mode = #tpu.pipeline_mode<synchronous>, transform_indices = @transform_1, window_bounds = array<i64: 32, 64>}, {pipeline_mode = #tpu.pipeline_mode<synchronous>, transform_indices = @transform_2, window_bounds = array<i64: 1, 64>}, {pipeline_mode = #tpu.pipeline_mode<synchronous>, transform_indices = @transform_3, window_bounds = array<i64: 64, 32>}, {pipeline_mode = #tpu.pipeline_mode<synchronous>, transform_indices = @transform_4, window_bounds = array<i64: 1, 32>}, {transform_indices = @transform_5, window_bounds = array<i64: 256, 32>}]} {
    %c0 = arith.constant 0 : index
    %c0_0 = arith.constant 0 : index
    %0 = vector.load %arg1[%c0, %c0_0] : memref<256x32xf32, #tpu.memory_space<vmem>>, vector<256x32xf32>
    %1 = arith.truncf %0 : vector<256x32xf32> to vector<256x32xbf16>
    %c0_1 = arith.constant 0 : index
    %c0_2 = arith.constant 0 : index
    %2 = vector.load %arg2[%c0_1, %c0_2] : memref<32x64xbf16, #tpu.memory_space<vmem>>, vector<32x64xbf16>
    %cst = arith.constant dense<0.000000e+00> : vector<256x64xf32>
    %3 = tpu.matmul %1, %2, %cst {dimension_numbers = #tpu.dot_dimension_numbers<[1], [0], [0], [1], [0, 0, 1, 1], [], []>} : vector<256x32xbf16>, vector<32x64xbf16>, vector<256x64xf32> -> vector<256x64xf32>
    %c0_3 = arith.constant 0 : index
    %c0_4 = arith.constant 0 : index
    %4 = vector.load %arg3[%c0_3, %c0_4] : memref<1x64xf32, #tpu.memory_space<vmem>>, vector<1x64xf32>
    %5 = vector.broadcast %4 : vector<1x64xf32> to vector<256x64xf32>
    %6 = arith.addf %3, %5 : vector<256x64xf32>
    %cst_5 = arith.constant 0.000000e+00 : f32
    %7 = vector.broadcast %cst_5 : f32 to vector<256x64xf32>
    %8 = arith.maximumf %6, %7 : vector<256x64xf32>
    %9 = arith.truncf %8 : vector<256x64xf32> to vector<256x64xbf16>
    %c0_6 = arith.constant 0 : index
    %c0_7 = arith.constant 0 : index
    %10 = vector.load %arg4[%c0_6, %c0_7] : memref<64x32xbf16, #tpu.memory_space<vmem>>, vector<64x32xbf16>
    %cst_8 = arith.constant dense<0.000000e+00> : vector<256x32xf32>
    %11 = tpu.matmul %9, %10, %cst_8 {dimension_numbers = #tpu.dot_dimension_numbers<[1], [0], [0], [1], [0, 0, 1, 1], [], []>} : vector<256x64xbf16>, vector<64x32xbf16>, vector<256x32xf32> -> vector<256x32xf32>
    %c0_9 = arith.constant 0 : index
    %c0_10 = arith.constant 0 : index
    %12 = vector.load %arg5[%c0_9, %c0_10] : memref<1x32xf32, #tpu.memory_space<vmem>>, vector<1x32xf32>
    %13 = vector.broadcast %12 : vector<1x32xf32> to vector<256x32xf32>
    %14 = arith.addf %11, %13 : vector<256x32xf32>
    %c0_11 = arith.constant 0 : index
    %c0_12 = arith.constant 0 : index
    %15 = vector.load %arg6[%c0_11, %c0_12] : memref<256x32xf32, #tpu.memory_space<vmem>>, vector<256x32xf32>
    tpu.vector_store %arg6[%c0_11, %c0_12], %14 {strides = array<i32>} : memref<256x32xf32, #tpu.memory_space<vmem>>, vector<256x32xf32>,
    return
  }
  func.func @transform_0(%arg0: i32) -> (i32, i32) {
    %c0_i32 = arith.constant 0 : i32
    %c0_i32_0 = arith.constant 0 : i32
    return %arg0, %c0_i32 : i32, i32
  }
  func.func @transform_1(%arg0: i32) -> (i32, i32) {
    %c0_i32 = arith.constant 0 : i32
    %c0_i32_0 = arith.constant 0 : i32
    %c0_i32_1 = arith.constant 0 : i32
    return %c0_i32, %c0_i32_0 : i32, i32
  }
  func.func @transform_2(%arg0: i32) -> (i32, i32) {
    %c0_i32 = arith.constant 0 : i32
    %c0_i32_0 = arith.constant 0 : i32
    %c0_i32_1 = arith.constant 0 : i32
    return %c0_i32, %c0_i32_0 : i32, i32
  }
  func.func @transform_3(%arg0: i32) -> (i32, i32) {
    %c0_i32 = arith.constant 0 : i32
    %c0_i32_0 = arith.constant 0 : i32
    %c0_i32_1 = arith.constant 0 : i32
    return %c0_i32, %c0_i32_0 : i32, i32
  }
  func.func @transform_4(%arg0: i32) -> (i32, i32) {
    %c0_i32 = arith.constant 0 : i32
    %c0_i32_0 = arith.constant 0 : i32
    %c0_i32_1 = arith.constant 0 : i32
    return %c0_i32, %c0_i32_0 : i32, i32
  }
  func.func @transform_5(%arg0: i32) -> (i32, i32) {
    %c0_i32 = arith.constant 0 : i32
    %c0_i32_0 = arith.constant 0 : i32
    return %arg0, %c0_i32 : i32, i32
  }
}

</mosaic_0001>

<llo_original>
// kernel: tpu_custom_call.1
$region0: #{tpu_custom_call.1}
  #allocation0 [shape = 'u32[]', space=smem, size = 0x4, offset = 0x4, fixed_abs, tag = 'smem constant byte address 0x4 - core index']
  #allocation1 [shape = 'u32[72,128]{1,0:T(1,128)}', space=vmem, size = 0x9000, scoped, tag = 'internal scratch']
  %s0 = inlined_call_operand.vmem [shape: f32[256,32], index: 0, kind: input, shape index: {}]
  %s1 = inlined_call_operand.vmem [shape: bf16[32,64], index: 1, kind: input, shape index: {}]
  %s2 = inlined_call_operand.vmem [shape: f32[1,64], index: 2, kind: input, shape index: {}]
  %s3 = inlined_call_operand.vmem [shape: bf16[64,32], index: 3, kind: input, shape index: {}]
  %s4 = inlined_call_operand.vmem [shape: f32[1,32], index: 4, kind: input, shape index: {}]
  %s5 = inlined_call_operand.vmem [shape: f32[256,32], index: 5, kind: output, shape index: {}]
  %s6 = sld [smem:[#allocation0]]
  $region30: #{tpu_custom_call.1} parent=0
    _
  %s8 = ssub.s32 1, %s6
  %s9 = scalar_select 0, %s8, %s6
  // Predicated region
  $region2: #{tpu_custom_call.1} parent=0 // pred_check
    _
  $region3: #{tpu_custom_call.1} parent=0 // pred_check_branch
    %11 = sbr.rel (0) target = $region5
  $region4: #{tpu_custom_call.1} parent=0 // pred_region
    _
  $region5: #{tpu_custom_call.1} parent=0 // pred_fallthru
    _
  // Predicated region
  $region6: #{tpu_custom_call.1} parent=0 // pred_check
    _
  $region7: #{tpu_custom_call.1} parent=0 // pred_check_branch
    %13 = sbr.rel (0) target = $region9
  $region8: #{tpu_custom_call.1} parent=0 // pred_region
    _
  $region9: #{tpu_custom_call.1} parent=0 // pred_fallthru
    _
  // Predicated region
  $region10: #{tpu_custom_call.1} parent=0 // pred_check
    _
  $region11: #{tpu_custom_call.1} parent=0 // pred_check_branch
    %15 = sbr.rel (0) target = $region13
  $region12: #{tpu_custom_call.1} parent=0 // pred_region
    _
  $region13: #{tpu_custom_call.1} parent=0 // pred_fallthru
    _
  // Predicated region
  $region14: #{tpu_custom_call.1} parent=0 // pred_check
    _
  $region15: #{tpu_custom_call.1} parent=0 // pred_check_branch
    %17 = sbr.rel (0) target = $region17
  $region16: #{tpu_custom_call.1} parent=0 // pred_region
    _
  $region17: #{tpu_custom_call.1} parent=0 // pred_fallthru
    _
  // Predicated region
  $region18: #{tpu_custom_call.1} parent=0 // pred_check
    _
  $region19: #{tpu_custom_call.1} parent=0 // pred_check_branch
    %19 = sbr.rel (0) target = $region21
  $region20: #{tpu_custom_call.1} parent=0 // pred_region
    _
  $region21: #{tpu_custom_call.1} parent=0 // pred_fallthru
    _
  %v21 = vld [vmem:[%s0] sm:$0xff]
  %v22 = vld [vmem:[%s0 + $0x8] sm:$0xff]
  %v23 = vld [vmem:[%s0 + $0x10] sm:$0xff]
  %v24 = vld [vmem:[%s0 + $0x18] sm:$0xff]
  %v25 = vld [vmem:[%s0 + $0x20] sm:$0xff]
  %v26 = vld [vmem:[%s0 + $0x28] sm:$0xff]
  %v27 = vld [vmem:[%s0 + $0x30] sm:$0xff]
  %v28 = vld [vmem:[%s0 + $0x38] sm:$0xff]
  %v29 = vld [vmem:[%s0 + $0x40] sm:$0xff]
  %v30 = vld [vmem:[%s0 + $0x48] sm:$0xff]
  %v31 = vld [vmem:[%s0 + $0x50] sm:$0xff]
  %v32 = vld [vmem:[%s0 + $0x58] sm:$0xff]
  %v33 = vld [vmem:[%s0 + $0x60] sm:$0xff]
  %v34 = vld [vmem:[%s0 + $0x68] sm:$0xff]
  %v35 = vld [vmem:[%s0 + $0x70] sm:$0xff]
  %v36 = vld [vmem:[%s0 + $0x78] sm:$0xff]
  %v37 = vld [vmem:[%s0 + $0x80] sm:$0xff]
  %v38 = vld [vmem:[%s0 + $0x88] sm:$0xff]
  %v39 = vld [vmem:[%s0 + $0x90] sm:$0xff]
  %v40 = vld [vmem:[%s0 + $0x98] sm:$0xff]
  %v41 = vld [vmem:[%s0 + $0xa0] sm:$0xff]
  %v42 = vld [vmem:[%s0 + $0xa8] sm:$0xff]
  %v43 = vld [vmem:[%s0 + $0xb0] sm:$0xff]
  %v44 = vld [vmem:[%s0 + $0xb8] sm:$0xff]
  %v45 = vld [vmem:[%s0 + $0xc0] sm:$0xff]
  %v46 = vld [vmem:[%s0 + $0xc8] sm:$0xff]
  %v47 = vld [vmem:[%s0 + $0xd0] sm:$0xff]
  %v48 = vld [vmem:[%s0 + $0xd8] sm:$0xff]
  %v49 = vld [vmem:[%s0 + $0xe0] sm:$0xff]
  %v50 = vld [vmem:[%s0 + $0xe8] sm:$0xff]
  %v51 = vld [vmem:[%s0 + $0xf0] sm:$0xff]
  %v52 = vld [vmem:[%s0 + $0xf8] sm:$0xff]
  %v53 = vpack.c.bf16 %v22, %v21
  %v54 = vpack.c.bf16 %v24, %v23
  %v55 = vpack.c.bf16 %v26, %v25
  %v56 = vpack.c.bf16 %v28, %v27
  %v57 = vpack.c.bf16 %v30, %v29
  %v58 = vpack.c.bf16 %v32, %v31
  %v59 = vpack.c.bf16 %v34, %v33
  %v60 = vpack.c.bf16 %v36, %v35
  %v61 = vpack.c.bf16 %v38, %v37
  %v62 = vpack.c.bf16 %v40, %v39
  %v63 = vpack.c.bf16 %v42, %v41
  %v64 = vpack.c.bf16 %v44, %v43
  %v65 = vpack.c.bf16 %v46, %v45
  %v66 = vpack.c.bf16 %v48, %v47
  %v67 = vpack.c.bf16 %v50, %v49
  %v68 = vpack.c.bf16 %v52, %v51
  %v69 = vld [vmem:[%s1] sm:$0xf]
  %v70 = vld [vmem:[%s1 + $0x4] sm:$0xf]
  %v71 = vld [vmem:[%s1 + $0x8] sm:$0xf]
  %v72 = vld [vmem:[%s1 + $0xc] sm:$0xf]
  %v73 = vld [vmem:[%s2] sm:$0x1]
  %v75 = vperm.slane %v73, 0
  %v81 = vunpack.c.l.b16 %v69
  %v82 = vunpack.c.l.b16 %v70
  %v83 = vunpack.c.l.b16 %v71
  %v84 = vunpack.c.l.b16 %v72
  %v85 = vpack.c.b16 %v82, %v81
  %v86 = vpack.c.b16 %v84, %v83
  %vm89 = vcmask 261120
  %v91 = vsel %vm89, %v53, 0
  %v94 = vsel %vm89, %v54, 0
  %v97 = vsel %vm89, %v55, 0
  %v100 = vsel %vm89, %v56, 0
  %v103 = vsel %vm89, %v57, 0
  %v106 = vsel %vm89, %v58, 0
  %v109 = vsel %vm89, %v59, 0
  %v112 = vsel %vm89, %v60, 0
  %v115 = vsel %vm89, %v61, 0
  %v118 = vsel %vm89, %v62, 0
  %v121 = vsel %vm89, %v63, 0
  %v124 = vsel %vm89, %v64, 0
  %v127 = vsel %vm89, %v65, 0
  %v130 = vsel %vm89, %v66, 0
  %v133 = vsel %vm89, %v67, 0
  %v136 = vsel %vm89, %v68, 0
  %138 = vmatpush.bf16.msra.mxu0 0
  %139 = vmatpush.bf16.msra.mxu0 0
  %140 = vmatpush.bf16.msra.mxu0 0
  %141 = vmatpush.bf16.msra.mxu0 0
  %142 = vmatpush.bf16.msra.mxu0 0
  %143 = vmatpush.bf16.msra.mxu0 0
  %144 = vmatpush.bf16.msra.mxu0 %v86
  %145 = vmatpush.bf16.msra.mxu0 %v85
  %146 = vmatmul.bf16.gmra.mxu0 %v91
  %v147 = vpop.f32.mrf.mxu0
  %v148 = vadd.f32 %v75, %v147
  %v149 = vpop.f32.mrf.mxu0
  %v150 = vadd.f32 %v75, %v149
  %151 = vmatmul.bf16.gmra.mxu0 %v94
  %v152 = vpop.f32.mrf.mxu0
  %v153 = vadd.f32 %v75, %v152
  %v154 = vpop.f32.mrf.mxu0
  %v155 = vadd.f32 %v75, %v154
  %156 = vmatmul.bf16.gmra.mxu0 %v97
  %v157 = vpop.f32.mrf.mxu0
  %v158 = vadd.f32 %v75, %v157
  %v159 = vpop.f32.mrf.mxu0
  %v160 = vadd.f32 %v75, %v159
  %161 = vmatmul.bf16.gmra.mxu0 %v100
  %v162 = vpop.f32.mrf.mxu0
  %v163 = vadd.f32 %v75, %v162
  %v164 = vpop.f32.mrf.mxu0
  %v165 = vadd.f32 %v75, %v164
  %166 = vmatmul.bf16.gmra.mxu0 %v103
  %v167 = vpop.f32.mrf.mxu0
  %v168 = vadd.f32 %v75, %v167
  %v169 = vpop.f32.mrf.mxu0
  %v170 = vadd.f32 %v75, %v169
  %171 = vmatmul.bf16.gmra.mxu0 %v106
  %v172 = vpop.f32.mrf.mxu0
  %v173 = vadd.f32 %v75, %v172
  %v174 = vpop.f32.mrf.mxu0
  %v175 = vadd.f32 %v75, %v174
  %176 = vmatmul.bf16.gmra.mxu0 %v109
  %v177 = vpop.f32.mrf.mxu0
  %v178 = vadd.f32 %v75, %v177
  %v179 = vpop.f32.mrf.mxu0
  %v180 = vadd.f32 %v75, %v179
  %181 = vmatmul.bf16.gmra.mxu0 %v112
  %v182 = vpop.f32.mrf.mxu0
  %v183 = vadd.f32 %v75, %v182
  %v184 = vpop.f32.mrf.mxu0
  %v185 = vadd.f32 %v75, %v184
  %186 = vmatmul.bf16.gmra.mxu0 %v115
  %v187 = vpop.f32.mrf.mxu0
  %v188 = vadd.f32 %v75, %v187
  %v189 = vpop.f32.mrf.mxu0
  %v190 = vadd.f32 %v75, %v189
  %191 = vmatmul.bf16.gmra.mxu0 %v118
  %v192 = vpop.f32.mrf.mxu0
  %v193 = vadd.f32 %v75, %v192
  %v194 = vpop.f32.mrf.mxu0
  %v195 = vadd.f32 %v75, %v194
  %196 = vmatmul.bf16.gmra.mxu0 %v121
  %v197 = vpop.f32.mrf.mxu0
  %v198 = vadd.f32 %v75, %v197
  %v199 = vpop.f32.mrf.mxu0
  %v200 = vadd.f32 %v75, %v199
  %201 = vmatmul.bf16.gmra.mxu0 %v124
  %v202 = vpop.f32.mrf.mxu0
  %v203 = vadd.f32 %v75, %v202
  %v204 = vpop.f32.mrf.mxu0
  %v205 = vadd.f32 %v75, %v204
  %206 = vmatmul.bf16.gmra.mxu0 %v127
  %v207 = vpop.f32.mrf.mxu0
  %v208 = vadd.f32 %v75, %v207
  %v209 = vpop.f32.mrf.mxu0
  %v210 = vadd.f32 %v75, %v209
  %211 = vmatmul.bf16.gmra.mxu0 %v130
  %v212 = vpop.f32.mrf.mxu0
  %v213 = vadd.f32 %v75, %v212
  %v214 = vpop.f32.mrf.mxu0
  %v215 = vadd.f32 %v75, %v214
  %216 = vmatmul.bf16.gmra.mxu0 %v133
  %v217 = vpop.f32.mrf.mxu0
  %v218 = vadd.f32 %v75, %v217
  %v219 = vpop.f32.mrf.mxu0
  %v220 = vadd.f32 %v75, %v219
  %221 = vmatmul.bf16.gmra.mxu0 %v136
  %v222 = vpop.f32.mrf.mxu0
  %v223 = vadd.f32 %v75, %v222
  %v224 = vpop.f32.mrf.mxu0
  %v225 = vadd.f32 %v75, %v224
  %226 = vdwg.mxu0
  %v227 = vmax.f32 %v148, 0.0
  %v228 = vmax.f32 %v150, 0.0
  %v229 = vmax.f32 %v153, 0.0
  %v230 = vmax.f32 %v155, 0.0
  %v231 = vmax.f32 %v158, 0.0
  %v232 = vmax.f32 %v160, 0.0
  %v233 = vmax.f32 %v163, 0.0
  %v234 = vmax.f32 %v165, 0.0
  %v235 = vmax.f32 %v168, 0.0
  %v236 = vmax.f32 %v170, 0.0
  %v237 = vmax.f32 %v173, 0.0
  %v238 = vmax.f32 %v175, 0.0
  %v239 = vmax.f32 %v178, 0.0
  %v240 = vmax.f32 %v180, 0.0
  %v241 = vmax.f32 %v183, 0.0
  %v242 = vmax.f32 %v185, 0.0
  %v243 = vmax.f32 %v188, 0.0
  %v244 = vmax.f32 %v190, 0.0
  %v245 = vmax.f32 %v193, 0.0
  %v246 = vmax.f32 %v195, 0.0
  %v247 = vmax.f32 %v198, 0.0
  %v248 = vmax.f32 %v200, 0.0
  %v249 = vmax.f32 %v203, 0.0
  %v250 = vmax.f32 %v205, 0.0
  %v251 = vmax.f32 %v208, 0.0
  %v252 = vmax.f32 %v210, 0.0
  %v253 = vmax.f32 %v213, 0.0
  %v254 = vmax.f32 %v215, 0.0
  %v255 = vmax.f32 %v218, 0.0
  %v256 = vmax.f32 %v220, 0.0
  %v257 = vmax.f32 %v223, 0.0
  %v258 = vmax.f32 %v225, 0.0
  %v259 = vpack.c.bf16 %v228, %v227
  %v260 = vpack.c.bf16 %v230, %v229
  %v261 = vpack.c.bf16 %v232, %v231
  %v262 = vpack.c.bf16 %v234, %v233
  %v263 = vpack.c.bf16 %v236, %v235
  %v264 = vpack.c.bf16 %v238, %v237
  %v265 = vpack.c.bf16 %v240, %v239
  %v266 = vpack.c.bf16 %v242, %v241
  %v267 = vpack.c.bf16 %v244, %v243
  %v268 = vpack.c.bf16 %v246, %v245
  %v269 = vpack.c.bf16 %v248, %v247
  %v270 = vpack.c.bf16 %v250, %v249
  %v271 = vpack.c.bf16 %v252, %v251
  %v272 = vpack.c.bf16 %v254, %v253
  %v273 = vpack.c.bf16 %v256, %v255
  %v274 = vpack.c.bf16 %v258, %v257
  %v275 = vld [vmem:[%s3] sm:$0xf]
  %v276 = vld [vmem:[%s3 + $0x4] sm:$0xf]
  %v277 = vld [vmem:[%s3 + $0x8] sm:$0xf]
  %v278 = vld [vmem:[%s3 + $0xc] sm:$0xf]
  %v279 = vld [vmem:[%s3 + $0x10] sm:$0xf]
  %v280 = vld [vmem:[%s3 + $0x14] sm:$0xf]
  %v281 = vld [vmem:[%s3 + $0x18] sm:$0xf]
  %v282 = vld [vmem:[%s3 + $0x1c] sm:$0xf]
  %v283 = vld [vmem:[%s4] sm:$0x1]
  %v285 = vperm.slane %v283, 0
  %v295 = vunpack.c.l.b16 %v275
  %v296 = vunpack.c.l.b16 %v276
  %v297 = vunpack.c.l.b16 %v277
  %v298 = vunpack.c.l.b16 %v278
  %v299 = vunpack.c.l.b16 %v279
  %v300 = vunpack.c.l.b16 %v280
  %v301 = vunpack.c.l.b16 %v281
  %v302 = vunpack.c.l.b16 %v282
  %v303 = vpack.c.b16 %v296, %v295
  %v304 = vpack.c.b16 %v298, %v297
  %v305 = vpack.c.b16 %v300, %v299
  %v306 = vpack.c.b16 %v302, %v301
  %vm311 = vcmask 523264
  %v313 = vsel %vm311, %v259, 0
  %v316 = vsel %vm311, %v260, 0
  %v319 = vsel %vm311, %v261, 0
  %v322 = vsel %vm311, %v262, 0
  %v325 = vsel %vm311, %v263, 0
  %v328 = vsel %vm311, %v264, 0
  %v331 = vsel %vm311, %v265, 0
  %v334 = vsel %vm311, %v266, 0
  %v337 = vsel %vm311, %v267, 0
  %v340 = vsel %vm311, %v268, 0
  %v343 = vsel %vm311, %v269, 0
  %v346 = vsel %vm311, %v270, 0
  %v349 = vsel %vm311, %v271, 0
  %v352 = vsel %vm311, %v272, 0
  %v355 = vsel %vm311, %v273, 0
  %v358 = vsel %vm311, %v274, 0
  %360 = vmatpush.bf16.msra.mxu0 0
  %361 = vmatpush.bf16.msra.mxu0 0
  %362 = vmatpush.bf16.msra.mxu0 0
  %363 = vmatpush.bf16.msra.mxu0 0
  %364 = vmatpush.bf16.msra.mxu0 %v306
  %365 = vmatpush.bf16.msra.mxu0 %v305
  %366 = vmatpush.bf16.msra.mxu0 %v304
  %367 = vmatpush.bf16.msra.mxu0 %v303
  %368 = vmatmul.bf16.gmra.mxu0 %v313
  %v369 = vpop.f32.mrf.mxu0
  %v370 = vadd.f32 %v285, %v369
  %v371 = vpop.f32.mrf.mxu0
  %v372 = vadd.f32 %v285, %v371
  %373 = vmatmul.bf16.gmra.mxu0 %v316
  %v374 = vpop.f32.mrf.mxu0
  %v375 = vadd.f32 %v285, %v374
  %v376 = vpop.f32.mrf.mxu0
  %v377 = vadd.f32 %v285, %v376
  %378 = vmatmul.bf16.gmra.mxu0 %v319
  %v379 = vpop.f32.mrf.mxu0
  %v380 = vadd.f32 %v285, %v379
  %v381 = vpop.f32.mrf.mxu0
  %v382 = vadd.f32 %v285, %v381
  %383 = vmatmul.bf16.gmra.mxu0 %v322
  %v384 = vpop.f32.mrf.mxu0
  %v385 = vadd.f32 %v285, %v384
  %v386 = vpop.f32.mrf.mxu0
  %v387 = vadd.f32 %v285, %v386
  %388 = vmatmul.bf16.gmra.mxu0 %v325
  %v389 = vpop.f32.mrf.mxu0
  %v390 = vadd.f32 %v285, %v389
  %v391 = vpop.f32.mrf.mxu0
  %v392 = vadd.f32 %v285, %v391
  %393 = vmatmul.bf16.gmra.mxu0 %v328
  %v394 = vpop.f32.mrf.mxu0
  %v395 = vadd.f32 %v285, %v394
  %v396 = vpop.f32.mrf.mxu0
  %v397 = vadd.f32 %v285, %v396
  %398 = vmatmul.bf16.gmra.mxu0 %v331
  %v399 = vpop.f32.mrf.mxu0
  %v400 = vadd.f32 %v285, %v399
  %v401 = vpop.f32.mrf.mxu0
  %v402 = vadd.f32 %v285, %v401
  %403 = vmatmul.bf16.gmra.mxu0 %v334
  %v404 = vpop.f32.mrf.mxu0
  %v405 = vadd.f32 %v285, %v404
  %v406 = vpop.f32.mrf.mxu0
  %v407 = vadd.f32 %v285, %v406
  %408 = vmatmul.bf16.gmra.mxu0 %v337
  %v409 = vpop.f32.mrf.mxu0
  %v410 = vadd.f32 %v285, %v409
  %v411 = vpop.f32.mrf.mxu0
  %v412 = vadd.f32 %v285, %v411
  %413 = vmatmul.bf16.gmra.mxu0 %v340
  %v414 = vpop.f32.mrf.mxu0
  %v415 = vadd.f32 %v285, %v414
  %v416 = vpop.f32.mrf.mxu0
  %v417 = vadd.f32 %v285, %v416
  %418 = vmatmul.bf16.gmra.mxu0 %v343
  %v419 = vpop.f32.mrf.mxu0
  %v420 = vadd.f32 %v285, %v419
  %v421 = vpop.f32.mrf.mxu0
  %v422 = vadd.f32 %v285, %v421
  %423 = vmatmul.bf16.gmra.mxu0 %v346
  %v424 = vpop.f32.mrf.mxu0
  %v425 = vadd.f32 %v285, %v424
  %v426 = vpop.f32.mrf.mxu0
  %v427 = vadd.f32 %v285, %v426
  %428 = vmatmul.bf16.gmra.mxu0 %v349
  %v429 = vpop.f32.mrf.mxu0
  %v430 = vadd.f32 %v285, %v429
  %v431 = vpop.f32.mrf.mxu0
  %v432 = vadd.f32 %v285, %v431
  %433 = vmatmul.bf16.gmra.mxu0 %v352
  %v434 = vpop.f32.mrf.mxu0
  %v435 = vadd.f32 %v285, %v434
  %v436 = vpop.f32.mrf.mxu0
  %v437 = vadd.f32 %v285, %v436
  %438 = vmatmul.bf16.gmra.mxu0 %v355
  %v439 = vpop.f32.mrf.mxu0
  %v440 = vadd.f32 %v285, %v439
  %v441 = vpop.f32.mrf.mxu0
  %v442 = vadd.f32 %v285, %v441
  %443 = vmatmul.bf16.gmra.mxu0 %v358
  %v444 = vpop.f32.mrf.mxu0
  %v445 = vadd.f32 %v285, %v444
  %v446 = vpop.f32.mrf.mxu0
  %v447 = vadd.f32 %v285, %v446
  %448 = vdwg.mxu0
  %449 = vst.msk [vmem:[%s5] sm:$0xff] %vm89, %v370
  %450 = vst.msk [vmem:[%s5 + $0x8] sm:$0xff] %vm89, %v372
  %451 = vst.msk [vmem:[%s5 + $0x10] sm:$0xff] %vm89, %v375
  %452 = vst.msk [vmem:[%s5 + $0x18] sm:$0xff] %vm89, %v377
  %453 = vst.msk [vmem:[%s5 + $0x20] sm:$0xff] %vm89, %v380
  %454 = vst.msk [vmem:[%s5 + $0x28] sm:$0xff] %vm89, %v382
  %455 = vst.msk [vmem:[%s5 + $0x30] sm:$0xff] %vm89, %v385
  %456 = vst.msk [vmem:[%s5 + $0x38] sm:$0xff] %vm89, %v387
  %457 = vst.msk [vmem:[%s5 + $0x40] sm:$0xff] %vm89, %v390
  %458 = vst.msk [vmem:[%s5 + $0x48] sm:$0xff] %vm89, %v392
  %459 = vst.msk [vmem:[%s5 + $0x50] sm:$0xff] %vm89, %v395
  %460 = vst.msk [vmem:[%s5 + $0x58] sm:$0xff] %vm89, %v397
  %461 = vst.msk [vmem:[%s5 + $0x60] sm:$0xff] %vm89, %v400
  %462 = vst.msk [vmem:[%s5 + $0x68] sm:$0xff] %vm89, %v402
  %463 = vst.msk [vmem:[%s5 + $0x70] sm:$0xff] %vm89, %v405
  %464 = vst.msk [vmem:[%s5 + $0x78] sm:$0xff] %vm89, %v407
  %465 = vst.msk [vmem:[%s5 + $0x80] sm:$0xff] %vm89, %v410
  %466 = vst.msk [vmem:[%s5 + $0x88] sm:$0xff] %vm89, %v412
  %467 = vst.msk [vmem:[%s5 + $0x90] sm:$0xff] %vm89, %v415
  %468 = vst.msk [vmem:[%s5 + $0x98] sm:$0xff] %vm89, %v417
  %469 = vst.msk [vmem:[%s5 + $0xa0] sm:$0xff] %vm89, %v420
  %470 = vst.msk [vmem:[%s5 + $0xa8] sm:$0xff] %vm89, %v422
  %471 = vst.msk [vmem:[%s5 + $0xb0] sm:$0xff] %vm89, %v425
  %472 = vst.msk [vmem:[%s5 + $0xb8] sm:$0xff] %vm89, %v427
  %473 = vst.msk [vmem:[%s5 + $0xc0] sm:$0xff] %vm89, %v430
  %474 = vst.msk [vmem:[%s5 + $0xc8] sm:$0xff] %vm89, %v432
  %475 = vst.msk [vmem:[%s5 + $0xd0] sm:$0xff] %vm89, %v435
  %476 = vst.msk [vmem:[%s5 + $0xd8] sm:$0xff] %vm89, %v437
  %477 = vst.msk [vmem:[%s5 + $0xe0] sm:$0xff] %vm89, %v440
  %478 = vst.msk [vmem:[%s5 + $0xe8] sm:$0xff] %vm89, %v442
  %479 = vst.msk [vmem:[%s5 + $0xf0] sm:$0xff] %vm89, %v445
  %480 = vst.msk [vmem:[%s5 + $0xf8] sm:$0xff] %vm89, %v447
  // Predicated region
  $region22: #{tpu_custom_call.1} parent=0 // pred_check
    _
  $region23: #{tpu_custom_call.1} parent=0 // pred_check_branch
    %482 = sbr.rel (0) target = $region25
  $region24: #{tpu_custom_call.1} parent=0 // pred_region
    _
  $region25: #{tpu_custom_call.1} parent=0 // pred_fallthru
    _
  // Predicated region
  $region26: #{tpu_custom_call.1} parent=0 // pred_check
    _
  $region27: #{tpu_custom_call.1} parent=0 // pred_check_branch
    %484 = sbr.rel (0) target = $region29
  $region28: #{tpu_custom_call.1} parent=0 // pred_region
    _
  $region29: #{tpu_custom_call.1} parent=0 // pred_fallthru
    _

</llo_original>
